<compile_context>
chip_gen: v5e
topology: v5e:2x2
jax: 0.10.0
libtpu: 0.0.40
codegen_flags: <defaults>
</compile_context>

<pallas_src>
import functools
import math

import jax
import jax.numpy as jnp
from jax import lax
from jax.experimental import pallas as pl
from jax.experimental.pallas import tpu as pltpu

_LANES = 128
_ACC_ROWS = 128            # accumulator height; divides every big-path block
_MAX_BLOCK_ROWS = 8192     # (8192, 128) f32 block = 4 MiB per input per step
_SMALL_ROWS = 1024         # at or below this many rows, single-block small path
_N_SPLITS = 2              # leading "parallel" grid axis (both TCs on v7x)
_VMEM_LIMIT = 32 * 1024 * 1024


def _ceil_div(a, b):
    return -(-a // b)


def _round_up(x, m):
    return _ceil_div(x, m) * m


def _mse_small_kernel(a_rec_ref, a_ref, out_ref):
    """Single-block path: whole [rows, 128] slab, one column reduction."""
    d = a_rec_ref[...].astype(jnp.float32) - a_ref[...].astype(jnp.float32)
    out_ref[...] = jnp.sum(d * d, axis=0, keepdims=True)


def _mse_block_kernel(a_rec_ref, a_ref, out_ref, acc_ref, *, block_rows, rows,
                      needs_mask):
    """Accumulate squared differences of one (block_rows, 128) tile.

    acc_ref is a fixed (_ACC_ROWS, 128) f32 VMEM scratch accumulator (decoupled
    from block_rows): each step the block's squared differences are slab-reduced
    into it with plain vreg adds; on the last inner step it is reduced to the
    tiny (8, 128) per-split output block.
    """
    i = pl.program_id(1)
    n_inner = pl.num_programs(1)
    n_slabs = block_rows // _ACC_ROWS

    @pl.when(i == 0)
    def _():
        acc_ref[...] = jnp.zeros_like(acc_ref)

    d = a_rec_ref[...].astype(jnp.float32) - a_ref[...].astype(jnp.float32)
    d2 = d * d

    def _accumulate(vals):
        acc_ref[...] += vals.reshape(n_slabs, _ACC_ROWS, _LANES).sum(axis=0)

    if needs_mask:
        # Unclamped global block id; the data DMA uses a clamped index, so an
        # overhanging / duplicated block must contribute only its valid rows.
        gb = pl.program_id(0) * n_inner + i
        valid_rows = rows - gb * block_rows      # may be <= 0 for duplicates

        @pl.when(valid_rows >= block_rows)       # full block: unmasked fast path
        def _():
            _accumulate(d2)

        @pl.when(valid_rows < block_rows)        # overhang / duplicate block
        def _():
            row_ids = lax.broadcasted_iota(jnp.int32, (block_rows, _LANES), 0)
            _accumulate(jnp.where(row_ids < valid_rows, d2, 0.0))
    else:
        _accumulate(d2)

    @pl.when(i == n_inner - 1)
    def _():
        out_ref[...] = acc_ref[...].reshape(_ACC_ROWS // 8, 8, _LANES).sum(axis=0)


def _plan_grid(rows):
    """Choose (block_rows, nsplit, bps, needs_mask) for the multi-block path."""
    block_rows = min(_MAX_BLOCK_ROWS, (rows // _LANES) * _LANES)
    tb = _ceil_div(rows, block_rows)
    if tb == 1:
        return block_rows, 1, 1, False
    if tb % 2:
        # Odd block count: try shrinking block_rows so the grid splits evenly
        # into two halves with no duplicated (clamped) blocks.
        cand = _round_up(_ceil_div(rows, tb + 1), _ACC_ROWS)
        tb2 = _ceil_div(rows, cand)
        if tb2 % 2 == 0:
            block_rows, tb = cand, tb2
        # else: keep the odd count; at most one clamped+masked duplicate block
        # (wasted DMA <= 1/tb of total traffic, only reachable for tb >~ 64).
    nsplit = _N_SPLITS if tb >= _N_SPLITS else 1
    bps = _ceil_div(tb, nsplit)
    needs_mask = (nsplit * bps * block_rows) != rows
    return block_rows, nsplit, bps, needs_mask


def rec_loss(a_rec, a):
    """MSE loss: mean over all elements of (a_rec - a)^2, computed in Pallas."""
    assert a_rec.shape == a.shape, "a_rec and a must have the same shape"
    total = math.prod(a_rec.shape)
    assert total > 0

    # Flatten (free bitcast for contiguous inputs); keep the input dtype so
    # bf16 inputs stream at half the HBM traffic, casting to f32 in-kernel.
    a_rec_f = jnp.ravel(a_rec)
    a_f = jnp.ravel(a)

    body = (total // _LANES) * _LANES
    rows = body // _LANES
    inv_n = jnp.float32(1.0 / total)

    # Ragged lane tail (< 128 elements): tiny separate reduction, no jnp.pad of
    # full copies of the inputs.
    # TODO(synk): XLA may still materialize the offset-0 body slice below; a
    # fully copy-free ragged path would need 1-D blocks or manual DMA.
    tail_sq = None
    if body != total:
        dt = a_rec_f[body:].astype(jnp.float32) - a_f[body:].astype(jnp.float32)
        tail_sq = jnp.sum(dt * dt)
        if rows == 0:
            return tail_sq * inv_n
        a_rec_f = a_rec_f[:body]
        a_f = a_f[:body]

    ar2 = a_rec_f.reshape(rows, _LANES)
    a2 = a_f.reshape(rows, _LANES)
    itemsize = ar2.dtype.itemsize
    cost = pl.CostEstimate(flops=3 * body, transcendentals=0,
                           bytes_accessed=2 * body * itemsize
                           + _N_SPLITS * 8 * _LANES * 4)

    if rows <= _SMALL_ROWS:
        partials = pl.pallas_call(
            _mse_small_kernel,
            out_shape=jax.ShapeDtypeStruct((1, _LANES), jnp.float32),
            cost_estimate=cost,
        )(ar2, a2)
    else:
        block_rows, nsplit, bps, needs_mask = _plan_grid(rows)
        last_block = _ceil_div(rows, block_rows) - 1

        if needs_mask:
            # Clamp so (rare) duplicate blocks re-read an in-range block; their
            # contribution is masked to zero inside the kernel.
            in_map = lambda c, i: (jnp.minimum(c * bps + i, last_block), 0)
        else:
            in_map = lambda c, i: (c * bps + i, 0)

        kernel = functools.partial(
            _mse_block_kernel,
            block_rows=block_rows,
            rows=rows,
            needs_mask=needs_mask,
        )

        partials = pl.pallas_call(
            kernel,
            out_shape=jax.ShapeDtypeStruct((nsplit, 8, _LANES), jnp.float32),
            grid_spec=pltpu.PrefetchScalarGridSpec(
                num_scalar_prefetch=0,
                grid=(nsplit, bps),
                in_specs=[
                    pl.BlockSpec((block_rows, _LANES), in_map),
                    pl.BlockSpec((block_rows, _LANES), in_map),
                ],
                out_specs=pl.BlockSpec((None, 8, _LANES),
                                       lambda c, i: (c, 0, 0)),
                scratch_shapes=[pltpu.VMEM((_ACC_ROWS, _LANES), jnp.float32)],
            ),
            compiler_params=pltpu.CompilerParams(
                # TODO(synk): verify in an xprof trace that "parallel" shards the
                # leading axis across v7x's two TensorCores; if not, switch that
                # axis to pltpu.CORE_PARALLEL there.
                dimension_semantics=("parallel", "arbitrary"),
                vmem_limit_bytes=_VMEM_LIMIT,
            ),
            cost_estimate=cost,
        )(ar2, a2)

    # Tiny final reduction + mean in the wrapper; reciprocal computed in Python
    # double precision to avoid f32 rounding of the element count.
    sum_sq = jnp.sum(partials)
    if tail_sq is not None:
        sum_sq = sum_sq + tail_sq
    return sum_sq * inv_n


if __name__ == "__main__":
    key = jax.random.PRNGKey(0)
    k1, k2, k3, k4, k5, k6 = jax.random.split(key, 6)

    # Small NCHW reconstruction shapes (single-block "small" path).
    a_rec = jax.random.normal(k1, (2, 4, 16, 16), dtype=jnp.float32)
    a = jax.random.normal(k2, (2, 4, 16, 16), dtype=jnp.float32)
    loss = jax.block_until_ready(rec_loss(a_rec, a))
    ref = jnp.mean((a_rec - a) ** 2)
    assert jnp.allclose(loss, ref, rtol=1e-5, atol=1e-6), (loss, ref)

    # Multi-block path: rows = 8250 > 8192 -> two-way parallel split, and the
    # overhanging last block exercises the pl.when-gated row mask.
    b_rec = jax.random.normal(k3, (2, 8, 264, 250), dtype=jnp.float32)
    b = jax.random.normal(k4, (2, 8, 264, 250), dtype=jnp.float32)
    loss2 = jax.block_until_ready(rec_loss(b_rec, b))
    ref2 = jnp.mean((b_rec - b) ** 2)
    assert jnp.allclose(loss2, ref2, rtol=1e-4, atol=1e-6), (loss2, ref2)

    # Ragged lane tail (numel % 128 != 0) exercises the no-pad tail path.
    c_rec = jax.random.normal(k5, (3, 5, 11, 13), dtype=jnp.float32)
    c = jax.random.normal(k6, (3, 5, 11, 13), dtype=jnp.float32)
    loss3 = jax.block_until_ready(rec_loss(c_rec, c))
    ref3 = jnp.mean((c_rec - c) ** 2)
    assert jnp.allclose(loss3, ref3, rtol=1e-5, atol=1e-6), (loss3, ref3)

    print("KERNEL_OK")
</pallas_src>

<mosaic_0001>
module attributes {stable_mosaic.version = 11 : i64} {
  func.func @_mse_small_kernel(%arg0: memref<16x128xf32, #tpu.memory_space<vmem>>, %arg1: memref<16x128xf32, #tpu.memory_space<vmem>>, %arg2: memref<1x128xf32, #tpu.memory_space<vmem>>) attributes {dimension_semantics = [], scalar_prefetch = 0 : i64, scratch_operands = 0 : i64, tpu.core_type = #tpu.core_type<tc>} {
    %c0 = arith.constant 0 : index
    %c0_0 = arith.constant 0 : index
    %0 = vector.load %arg0[%c0, %c0_0] : memref<16x128xf32, #tpu.memory_space<vmem>>, vector<16x128xf32>
    %c0_1 = arith.constant 0 : index
    %c0_2 = arith.constant 0 : index
    %1 = vector.load %arg1[%c0_1, %c0_2] : memref<16x128xf32, #tpu.memory_space<vmem>>, vector<16x128xf32>
    %2 = arith.subf %0, %1 : vector<16x128xf32>
    %3 = arith.mulf %2, %2 : vector<16x128xf32>
    %cst = arith.constant dense<0.000000e+00> : vector<128xf32>
    %4 = vector.multi_reduction <add>, %3, %cst [0] : vector<16x128xf32> to vector<128xf32>
    %5 = vector.shape_cast %4 : vector<128xf32> to vector<1x128xf32>
    %c0_3 = arith.constant 0 : index
    %c0_4 = arith.constant 0 : index
    %6 = vector.load %arg2[%c0_3, %c0_4] : memref<1x128xf32, #tpu.memory_space<vmem>>, vector<1x128xf32>
    tpu.vector_store %arg2[%c0_3, %c0_4], %5 {strides = array<i32>} : memref<1x128xf32, #tpu.memory_space<vmem>>, vector<1x128xf32>,
    return
  }
}

</mosaic_0001>

<llo_original>
// kernel: tpu_custom_call.1
$region0: #{tpu_custom_call.1}
  #allocation0 [shape = 'u32[]', space=smem, size = 0x4, offset = 0x4, fixed_abs, tag = 'smem constant byte address 0x4 - core index']
  #allocation1 [shape = 'u32[72,128]{1,0:T(1,128)}', space=vmem, size = 0x9000, scoped, tag = 'internal scratch']
  %s0 = inlined_call_operand.hbm [shape: f32[16,128], index: 0, kind: input, shape index: {}]
  %s1 = inlined_call_operand.hbm [shape: f32[16,128], index: 1, kind: input, shape index: {}]
  %s2 = inlined_call_operand.hbm [shape: f32[1,128], index: 2, kind: output, shape index: {}]
  %s3 = sld [smem:[#allocation0]]
  $region26: #{tpu_custom_call.1} parent=0
    _
  %s5 = ssub.s32 1, %s3
  %s6 = scalar_select 0, %s5, %s3
  $region1: #{tpu_custom_call.1} parent=0
    #allocation2 [shape = 'u8[8192]{0}', space=vmem, size = 0x2000, scoped, tag = 'input window, operand 0, single buffered']
    #allocation3 [shape = 's32[1]{0}', space=sflag, size = 0x4, scoped, tag = 'scoped memory for tpu_custom_call.1']
    #allocation4 [shape = 's32[1]{0}', space=sflag, size = 0x4, scoped, tag = 'scoped memory for tpu_custom_call.1']
    #allocation5 [shape = 'u8[8192]{0}', space=vmem, size = 0x2000, scoped, tag = 'input window, operand 1, single buffered']
    #allocation6 [shape = 's32[1]{0}', space=sflag, size = 0x4, scoped, tag = 'scoped memory for tpu_custom_call.1']
    #allocation7 [shape = 'u8[512]{0}', space=vmem, size = 0x400, scoped, tag = 'output window, operand 0, single buffered']
    %7 = vsyncpa [#allocation3], 0
    %8 = vsyncpa [#allocation6], 0
    %9 = vsyncpa [#allocation4], 0
    // Predicated region
    $region2: #{tpu_custom_call.1} parent=1 // pred_check
      _
    $region3: #{tpu_custom_call.1} parent=1 // pred_check_branch
      %11 = sbr.rel (0) target = $region5
    $region4: #{tpu_custom_call.1} parent=1 // pred_region
      %13 = vsyncadd [#allocation3], 0
      %s14 = sshll.u32 %s0, 4
      %s15 = int_to_ptr.hbm [resolvable:$true] %s14
      %s16 = sshll.u32 [#allocation2], 4
      %s17 = int_to_ptr.vmem [resolvable:$true] %s16
      %22 = dma.hbm_to_vmem [thread:$0]  %s15, 256, %s17, [#allocation3], 128, 128, 8
    $region5: #{tpu_custom_call.1} parent=1 // pred_fallthru
      _
    // Predicated region
    $region6: #{tpu_custom_call.1} parent=1 // pred_check
      _
    $region7: #{tpu_custom_call.1} parent=1 // pred_check_branch
      %24 = sbr.rel (0) target = $region9
    $region8: #{tpu_custom_call.1} parent=1 // pred_region
      %26 = vsyncadd [#allocation6], 0
      %s27 = sshll.u32 %s1, 4
      %s28 = int_to_ptr.hbm [resolvable:$true] %s27
      %s29 = sshll.u32 [#allocation5], 4
      %s30 = int_to_ptr.vmem [resolvable:$true] %s29
      %35 = dma.hbm_to_vmem [thread:$0]  %s28, 256, %s30, [#allocation6], 128, 128, 8
    $region9: #{tpu_custom_call.1} parent=1 // pred_fallthru
      _
    // Predicated region
    $region10: #{tpu_custom_call.1} parent=1 // pred_check
      _
    $region11: #{tpu_custom_call.1} parent=1 // pred_check_branch
      %37 = sbr.rel (0) target = $region13
    $region12: #{tpu_custom_call.1} parent=1 // pred_region
      %39 = dma.done [#allocation3], 256
    $region13: #{tpu_custom_call.1} parent=1 // pred_fallthru
      _
    // Predicated region
    $region14: #{tpu_custom_call.1} parent=1 // pred_check
      _
    $region15: #{tpu_custom_call.1} parent=1 // pred_check_branch
      %41 = sbr.rel (0) target = $region17
    $region16: #{tpu_custom_call.1} parent=1 // pred_region
      %43 = dma.done [#allocation6], 256
    $region17: #{tpu_custom_call.1} parent=1 // pred_fallthru
      _
    %v44 = vld [vmem:[#allocation2] sm:$0xff]
    %v45 = vld [vmem:[#allocation2 + $0x8] sm:$0xff]
    %v46 = vld [vmem:[#allocation5] sm:$0xff]
    %v47 = vld [vmem:[#allocation5 + $0x8] sm:$0xff]
    %v48 = vsub.f32 %v44, %v46
    %v49 = vsub.f32 %v45, %v47
    %v50 = vmul.f32 %v48, %v48
    %v51 = vmul.f32 %v49, %v49
    %v52 = vadd.f32 %v50, %v51
    %v53 = vrot.slane %v52, 4
    %v54 = vadd.f32 %v52, %v53
    %v55 = vrot.slane %v54, 2
    %v56 = vadd.f32 %v54, %v55
    %v57 = vrot.slane %v56, 1
    %v58 = vadd.f32 %v56, %v57
    %59 = vst [vmem:[#allocation7] sm:$0x1] %v58
    // Predicated region
    $region18: #{tpu_custom_call.1} parent=1 // pred_check
      _
    $region19: #{tpu_custom_call.1} parent=1 // pred_check_branch
      %61 = sbr.rel (0) target = $region21
    $region20: #{tpu_custom_call.1} parent=1 // pred_region
      %63 = vsyncadd [#allocation4], 0
      %s65 = sshll.u32 [#allocation7], 4
      %s66 = int_to_ptr.vmem [resolvable:$true] %s65
      %s67 = sshll.u32 %s2, 4
      %s68 = int_to_ptr.hbm [resolvable:$true] %s67
      %70 = dma.vmem_to_hbm [thread:$0]  %s66, 16, %s68, [#allocation4]
    $region21: #{tpu_custom_call.1} parent=1 // pred_fallthru
      _
    // Predicated region
    $region22: #{tpu_custom_call.1} parent=1 // pred_check
      _
    $region23: #{tpu_custom_call.1} parent=1 // pred_check_branch
      %72 = sbr.rel (0) target = $region25
    $region24: #{tpu_custom_call.1} parent=1 // pred_region
      %74 = dma.done [#allocation4], 16
    $region25: #{tpu_custom_call.1} parent=1 // pred_fallthru
      _
    %75 = vsyncpa [#allocation3], 1
    %76 = vsyncpa [#allocation6], 1
    %77 = vsyncpa [#allocation4], 1

</llo_original>
